<compile_context>
chip_gen: v7x
topology: tpu7x:2x2x1
jax: 0.10.0
libtpu: 0.0.40
codegen_flags: <defaults>
</compile_context>

<pallas_src>
import functools

import jax
import jax.numpy as jnp
from jax.experimental import pallas as pl
from jax.experimental.pallas import tpu as pltpu

HIDDEN = 256          # keep K=256 for the second matmul (one MXU pass on v6e/v7x)
SUBLANE = 8           # f32 sublane tile
MAX_TILE_B = 1024     # batch tile; per-step overhead amortization (VMEM is tiny)


def _round_up(x, m):
    return ((x + m - 1) // m) * m


def _actor_kernel(use_bf16_matmul):
    def kernel(s_ref, w1_ref, b1_ref, w2_ref, b2_ref, bounds_ref, o_ref):
        mid = bounds_ref[0]
        half = bounds_ref[1]

        s = s_ref[...]
        w1 = w1_ref[...]
        if use_bf16_matmul:
            s = s.astype(jnp.bfloat16)
            w1 = w1.astype(jnp.bfloat16)
        # Hidden layer: (TILE_B, state_dim) @ (state_dim, 256) -> relu
        h = jnp.dot(s, w1, preferred_element_type=jnp.float32)
        h = jnp.maximum(h + b1_ref[...], 0.0)

        w2 = w2_ref[...]
        if use_bf16_matmul:
            h = h.astype(jnp.bfloat16)
            w2 = w2.astype(jnp.bfloat16)
        # Output layer: (TILE_B, 256) @ (256, action_dim)
        y = jnp.dot(h, w2, preferred_element_type=jnp.float32)
        y = y + b2_ref[...]

        # Rescale tanh to [low, high] (all epilogue math in f32).
        o_ref[...] = (mid + half * jnp.tanh(y)).astype(o_ref.dtype)

    return kernel


@functools.partial(jax.jit, static_argnames=("use_bf16_matmul",))
def actor_forward(state, w1, b1, w2, b2, high, low, *, use_bf16_matmul=False):
    """Forward pass of the TD3 Actor.

    state: (B, state_dim) f32
    w1:    (state_dim, 256), b1: (256,)
    w2:    (256, action_dim), b2: (action_dim,)
    high/low: action bounds (traced scalars; no recompile when they change)
    """
    B, state_dim = state.shape
    hidden = w1.shape[1]
    action_dim = w2.shape[1]

    mid = (high + low) * 0.5
    half = (high - low) * 0.5
    bounds = jnp.stack([jnp.asarray(mid, jnp.float32),
                        jnp.asarray(half, jnp.float32)])

    # ---- Batch tiling: multiple of the f32 sublane tile; keep >=2 grid steps
    #      when the batch allows it so v7x's two TensorCores both get work. ----
    b_sub = _round_up(B, SUBLANE)
    half_tile = max(_round_up(pl.cdiv(b_sub, 2), SUBLANE), SUBLANE)
    tile_b = min(MAX_TILE_B, half_tile)
    b_pad = _round_up(B, tile_b)
    if b_pad != B:
        state = jnp.pad(state, ((0, b_pad - B), (0, 0)))

    # Biases as 2-D rows so they broadcast cleanly inside the kernel.
    b1_2d = b1.reshape(1, hidden)
    b2_2d = b2.reshape(1, action_dim)

    grid = (b_pad // tile_b,)

    out = pl.pallas_call(
        _actor_kernel(use_bf16_matmul),
        out_shape=jax.ShapeDtypeStruct((b_pad, action_dim), jnp.float32),
        grid=grid,
        in_specs=[
            # Batch-tiled state; state_dim stays at its full extent (legal even if <128).
            pl.BlockSpec((tile_b, state_dim), lambda i: (i, 0)),
            # Weights / biases: constant index maps -> resident across grid steps.
            pl.BlockSpec((state_dim, hidden), lambda i: (0, 0)),
            pl.BlockSpec((1, hidden), lambda i: (0, 0)),
            pl.BlockSpec((hidden, action_dim), lambda i: (0, 0)),
            pl.BlockSpec((1, action_dim), lambda i: (0, 0)),
            # mid/half as SMEM scalars (no recompile per (high, low) pair).
            pl.BlockSpec(memory_space=pltpu.MemorySpace.SMEM),
        ],
        out_specs=pl.BlockSpec((tile_b, action_dim), lambda i: (i, 0)),
        compiler_params=pltpu.CompilerParams(
            dimension_semantics=("parallel",),
        ),
    )(state, w1, b1_2d, w2, b2_2d, bounds)

    # Slice off batch padding only (no lane padding anymore).
    if b_pad != B:
        out = out[:B]
    return out


def init_actor_params(key, state_dim, action_dim, hidden=HIDDEN):
    """Deterministic init mimicking nn.Linear default (uniform +/- 1/sqrt(fan_in))."""
    k1, k2, k3, k4 = jax.random.split(key, 4)
    bound1 = 1.0 / jnp.sqrt(state_dim)
    bound2 = 1.0 / jnp.sqrt(hidden)
    w1 = jax.random.uniform(k1, (state_dim, hidden), jnp.float32, -bound1, bound1)
    b1 = jax.random.uniform(k2, (hidden,), jnp.float32, -bound1, bound1)
    w2 = jax.random.uniform(k3, (hidden, action_dim), jnp.float32, -bound2, bound2)
    b2 = jax.random.uniform(k4, (action_dim,), jnp.float32, -bound2, bound2)
    return w1, b1, w2, b2


def _reference(state, w1, b1, w2, b2, high, low):
    h = jnp.maximum(state @ w1 + b1, 0.0)
    return (high + low) / 2.0 + (high - low) / 2.0 * jnp.tanh(h @ w2 + b2)


if __name__ == "__main__":
    key = jax.random.PRNGKey(0)
    kp, ks1, ks2 = jax.random.split(key, 3)

    state_dim, action_dim = 8, 4
    high, low = 2.0, -2.0
    w1, b1, w2, b2 = init_actor_params(kp, state_dim, action_dim)

    # --- Small-batch check (B=2, original spec shapes) ---
    state_small = jax.random.normal(ks1, (2, state_dim), jnp.float32)
    out_small = actor_forward(state_small, w1, b1, w2, b2, high, low)
    out_small = jax.block_until_ready(out_small)
    ref_small = _reference(state_small, w1, b1, w2, b2, high, low)
    assert out_small.shape == (2, action_dim)
    assert jnp.allclose(out_small, ref_small, atol=1e-5, rtol=1e-5)

    # --- Multi-tile batched check (exercises grid > 1 and batch padding) ---
    B_big = 300  # b_sub=304 -> tile_b=152 -> b_pad=304 -> 2 grid steps
    state_big = jax.random.normal(ks2, (B_big, state_dim), jnp.float32)
    out_big = actor_forward(state_big, w1, b1, w2, b2, high, low)
    out_big = jax.block_until_ready(out_big)
    ref_big = _reference(state_big, w1, b1, w2, b2, high, low)
    assert out_big.shape == (B_big, action_dim)
    assert jnp.allclose(out_big, ref_big, atol=1e-5, rtol=1e-5)

    # --- Different bounds reuse the same compiled kernel (bounds live in SMEM) ---
    out_b2 = actor_forward(state_small, w1, b1, w2, b2, 1.0, 0.0)
    out_b2 = jax.block_until_ready(out_b2)
    ref_b2 = _reference(state_small, w1, b1, w2, b2, 1.0, 0.0)
    assert jnp.allclose(out_b2, ref_b2, atol=1e-5, rtol=1e-5)

    print("KERNEL_OK")
</pallas_src>

<mosaic_0001>
module attributes {stable_mosaic.version = 11 : i64} {
  func.func @kernel(%arg0: i32, %arg1: memref<8x8xf32, #tpu.memory_space<vmem>>, %arg2: memref<8x256xf32, #tpu.memory_space<vmem>>, %arg3: memref<1x256xf32, #tpu.memory_space<vmem>>, %arg4: memref<256x4xf32, #tpu.memory_space<vmem>>, %arg5: memref<1x4xf32, #tpu.memory_space<vmem>>, %arg6: memref<2xf32, #tpu.memory_space<smem>>, %arg7: memref<8x4xf32, #tpu.memory_space<vmem>>) attributes {dimension_semantics = [#tpu.dimension_semantics<parallel>], iteration_bounds = array<i64: 1>, scalar_prefetch = 0 : i64, scratch_operands = 0 : i64, tpu.core_type = #tpu.core_type<tc>, window_params = [{transform_indices = @transform_0, window_bounds = array<i64: 8, 8>}, {pipeline_mode = #tpu.pipeline_mode<synchronous>, transform_indices = @transform_1, window_bounds = array<i64: 8, 256>}, {pipeline_mode = #tpu.pipeline_mode<synchronous>, transform_indices = @transform_2, window_bounds = array<i64: 1, 256>}, {pipeline_mode = #tpu.pipeline_mode<synchronous>, transform_indices = @transform_3, window_bounds = array<i64: 256, 4>}, {pipeline_mode = #tpu.pipeline_mode<synchronous>, transform_indices = @transform_4, window_bounds = array<i64: 1, 4>}, {transform_indices = @transform_5, window_bounds = array<i64: 2>}, {transform_indices = @transform_6, window_bounds = array<i64: 8, 4>}]} {
    %c0 = arith.constant 0 : index
    %0 = memref.load %arg6[%c0] : memref<2xf32, #tpu.memory_space<smem>>
    %c1 = arith.constant 1 : index
    %1 = memref.load %arg6[%c1] : memref<2xf32, #tpu.memory_space<smem>>
    %c0_0 = arith.constant 0 : index
    %c0_1 = arith.constant 0 : index
    %2 = vector.load %arg1[%c0_0, %c0_1] : memref<8x8xf32, #tpu.memory_space<vmem>>, vector<8x8xf32>
    %c0_2 = arith.constant 0 : index
    %c0_3 = arith.constant 0 : index
    %3 = vector.load %arg2[%c0_2, %c0_3] : memref<8x256xf32, #tpu.memory_space<vmem>>, vector<8x256xf32>
    %cst = arith.constant dense<0.000000e+00> : vector<8x256xf32>
    %4 = tpu.matmul %2, %3, %cst {dimension_numbers = #tpu.dot_dimension_numbers<[1], [0], [0], [1], [0, 0, 1, 1], [], []>} : vector<8x8xf32>, vector<8x256xf32>, vector<8x256xf32> -> vector<8x256xf32>
    %c0_4 = arith.constant 0 : index
    %c0_5 = arith.constant 0 : index
    %5 = vector.load %arg3[%c0_4, %c0_5] : memref<1x256xf32, #tpu.memory_space<vmem>>, vector<1x256xf32>
    %6 = vector.broadcast %5 : vector<1x256xf32> to vector<8x256xf32>
    %7 = arith.addf %4, %6 : vector<8x256xf32>
    %cst_6 = arith.constant 0.000000e+00 : f32
    %8 = vector.broadcast %cst_6 : f32 to vector<8x256xf32>
    %9 = arith.maximumf %7, %8 : vector<8x256xf32>
    %c0_7 = arith.constant 0 : index
    %c0_8 = arith.constant 0 : index
    %10 = vector.load %arg4[%c0_7, %c0_8] : memref<256x4xf32, #tpu.memory_space<vmem>>, vector<256x4xf32>
    %cst_9 = arith.constant dense<0.000000e+00> : vector<8x4xf32>
    %11 = tpu.matmul %9, %10, %cst_9 {dimension_numbers = #tpu.dot_dimension_numbers<[1], [0], [0], [1], [0, 0, 1, 1], [], []>} : vector<8x256xf32>, vector<256x4xf32>, vector<8x4xf32> -> vector<8x4xf32>
    %c0_10 = arith.constant 0 : index
    %c0_11 = arith.constant 0 : index
    %12 = vector.load %arg5[%c0_10, %c0_11] : memref<1x4xf32, #tpu.memory_space<vmem>>, vector<1x4xf32>
    %13 = vector.broadcast %12 : vector<1x4xf32> to vector<8x4xf32>
    %14 = arith.addf %11, %13 : vector<8x4xf32>
    %15 = math.tanh %14 : vector<8x4xf32>
    %16 = vector.broadcast %1 : f32 to vector<8x4xf32>
    %17 = arith.mulf %16, %15 : vector<8x4xf32>
    %18 = vector.broadcast %0 : f32 to vector<8x4xf32>
    %19 = arith.addf %18, %17 : vector<8x4xf32>
    %c0_12 = arith.constant 0 : index
    %c0_13 = arith.constant 0 : index
    %20 = vector.load %arg7[%c0_12, %c0_13] : memref<8x4xf32, #tpu.memory_space<vmem>>, vector<8x4xf32>
    tpu.vector_store %arg7[%c0_12, %c0_13], %19 {strides = array<i32>} : memref<8x4xf32, #tpu.memory_space<vmem>>, vector<8x4xf32>,
    return
  }
  func.func @transform_0(%arg0: i32) -> (i32, i32) {
    %c0_i32 = arith.constant 0 : i32
    %c0_i32_0 = arith.constant 0 : i32
    return %arg0, %c0_i32 : i32, i32
  }
  func.func @transform_1(%arg0: i32) -> (i32, i32) {
    %c0_i32 = arith.constant 0 : i32
    %c0_i32_0 = arith.constant 0 : i32
    %c0_i32_1 = arith.constant 0 : i32
    return %c0_i32, %c0_i32_0 : i32, i32
  }
  func.func @transform_2(%arg0: i32) -> (i32, i32) {
    %c0_i32 = arith.constant 0 : i32
    %c0_i32_0 = arith.constant 0 : i32
    %c0_i32_1 = arith.constant 0 : i32
    return %c0_i32, %c0_i32_0 : i32, i32
  }
  func.func @transform_3(%arg0: i32) -> (i32, i32) {
    %c0_i32 = arith.constant 0 : i32
    %c0_i32_0 = arith.constant 0 : i32
    %c0_i32_1 = arith.constant 0 : i32
    return %c0_i32, %c0_i32_0 : i32, i32
  }
  func.func @transform_4(%arg0: i32) -> (i32, i32) {
    %c0_i32 = arith.constant 0 : i32
    %c0_i32_0 = arith.constant 0 : i32
    %c0_i32_1 = arith.constant 0 : i32
    return %c0_i32, %c0_i32_0 : i32, i32
  }
  func.func @transform_5(%arg0: i32) -> i32 {
    %c0_i32 = arith.constant 0 : i32
    %c0_i32_0 = arith.constant 0 : i32
    return %c0_i32 : i32
  }
  func.func @transform_6(%arg0: i32) -> (i32, i32) {
    %c0_i32 = arith.constant 0 : i32
    %c0_i32_0 = arith.constant 0 : i32
    return %arg0, %c0_i32 : i32, i32
  }
}

</mosaic_0001>

<llo_original>
// kernel: actor_forward.1
$region0: #{actor_forward.1}
  #allocation0 [shape = 'u32[]', space=smem, size = 0x4, offset = 0x4, fixed_abs, tag = 'smem constant byte address 0x4 - core index']
  #allocation1 [shape = 'u32[144,128]{1,0:T(1,128)}', space=vmem, size = 0x12000, scoped, tag = 'internal scratch']
  %s0 = inlined_call_operand.vmem [shape: f32[8,8], index: 0, kind: input, shape index: {}]
  %s1 = inlined_call_operand.vmem [shape: f32[8,256], index: 1, kind: input, shape index: {}]
  %s2 = inlined_call_operand.vmem [shape: f32[1,256], index: 2, kind: input, shape index: {}]
  %s3 = inlined_call_operand.vmem [shape: f32[256,4], index: 3, kind: input, shape index: {}]
  %s4 = inlined_call_operand.vmem [shape: f32[1,4], index: 4, kind: input, shape index: {}]
  %s5 = inlined_call_operand.vmem [shape: f32[2], index: 5, kind: input, shape index: {}]
  %s6 = inlined_call_operand.vmem [shape: f32[8,4], index: 6, kind: output, shape index: {}]
  %s7 = sld [smem:[#allocation0]]
  $region38: #{actor_forward.1} parent=0
    _
  %s9 = ssub.s32 1, %s7
  %s10 = scalar_select 0, %s9, %s7
  $region1: #{actor_forward.1} parent=0
    #allocation2 [shape = 'u8[512]{0}', space=smem, size = 0x200, scoped, tag = 'input window, operand 5, single buffered']
    #allocation3 [shape = 's32[1]{0}', space=sflag, size = 0x4, scoped, tag = 'scoped memory for actor_forward.1']
    %11 = vsyncpa [#allocation3], 0
    // Predicated region
    $region2: #{actor_forward.1} parent=1 // pred_check
      _
    $region3: #{actor_forward.1} parent=1 // pred_check_branch
      %13 = sbr.rel (0) target = $region5
    $region4: #{actor_forward.1} parent=1 // pred_region
      _
    $region5: #{actor_forward.1} parent=1 // pred_fallthru
      _
    // Predicated region
    $region6: #{actor_forward.1} parent=1 // pred_check
      _
    $region7: #{actor_forward.1} parent=1 // pred_check_branch
      %15 = sbr.rel (0) target = $region9
    $region8: #{actor_forward.1} parent=1 // pred_region
      _
    $region9: #{actor_forward.1} parent=1 // pred_fallthru
      _
    // Predicated region
    $region10: #{actor_forward.1} parent=1 // pred_check
      _
    $region11: #{actor_forward.1} parent=1 // pred_check_branch
      %17 = sbr.rel (0) target = $region13
    $region12: #{actor_forward.1} parent=1 // pred_region
      _
    $region13: #{actor_forward.1} parent=1 // pred_fallthru
      _
    // Predicated region
    $region14: #{actor_forward.1} parent=1 // pred_check
      _
    $region15: #{actor_forward.1} parent=1 // pred_check_branch
      %19 = sbr.rel (0) target = $region17
    $region16: #{actor_forward.1} parent=1 // pred_region
      _
    $region17: #{actor_forward.1} parent=1 // pred_fallthru
      _
    // Predicated region
    $region18: #{actor_forward.1} parent=1 // pred_check
      _
    $region19: #{actor_forward.1} parent=1 // pred_check_branch
      %21 = sbr.rel (0) target = $region21
    $region20: #{actor_forward.1} parent=1 // pred_region
      _
    $region21: #{actor_forward.1} parent=1 // pred_fallthru
      _
    // Predicated region
    $region22: #{actor_forward.1} parent=1 // pred_check
      _
    $region23: #{actor_forward.1} parent=1 // pred_check_branch
      %23 = sbr.rel (0) target = $region25
    $region24: #{actor_forward.1} parent=1 // pred_region
      %s25 = ssub.s32 16, 16
      %26 = vsyncadd [#allocation3], %s25
      %s28 = sshll.u32 %s5, 4
      %s29 = int_to_ptr.vmem [resolvable:$true] %s28
      %31 = dma.vmem_to_smem %s29, 16, [#allocation2], [#allocation3]
    $region25: #{actor_forward.1} parent=1 // pred_fallthru
      _
    // Predicated region
    $region26: #{actor_forward.1} parent=1 // pred_check
      _
    $region27: #{actor_forward.1} parent=1 // pred_check_branch
      %33 = sbr.rel (0) target = $region29
    $region28: #{actor_forward.1} parent=1 // pred_region
      %34 = dma.done [#allocation3], 16
    $region29: #{actor_forward.1} parent=1 // pred_fallthru
      _
    %35 = sfence
    %s36 = sld [smem:[#allocation2]]
    %s37 = sld [smem:[#allocation2 + $0x1]]
    %v38 = vld [vmem:[%s0] sm:$0xff]
    %v39 = vld [vmem:[%s1] sm:$0xff]
    %v40 = vld [vmem:[%s1 + $0x8] sm:$0xff]
    %v41 = vld [vmem:[%s2] sm:$0x3]
    %v43 = vlaneseq
    %v44 = vshrl.u32 %v43, 7
    %v45 = vsub.s32 0, %v44
    %v46 = vrot.slane %v41, %v45
    %v47 = vlaneseq
    %v48 = vshrl.u32 %v47, 7
    %v49 = vsub.s32 1, %v48
    %v50 = vrot.slane %v41, %v49
    %vm53 = vcmask 64512
    %v55 = vsel %vm53, %v38, 0
    %57 = vmatprep.subr.mxu0 %v40
    %58 = vmatpush1.msra.mxu0 %v39
    %59 = vmatprep.subr.mxu0 0.0
    %60 = vmatpush1.msra.mxu0 0.0
    %61 = vmatprep.subr.mxu0 0.0
    %62 = vmatpush1.msra.mxu0 0.0
    %63 = vmatprep.subr.mxu0 0.0
    %64 = vmatpush1.msra.mxu0 0.0
    %65 = vmatprep.subr.mxu0 0.0
    %66 = vmatpush1.msra.mxu0 0.0
    %67 = vmatprep.subr.mxu0 0.0
    %68 = vmatpush1.msra.mxu0 0.0
    %69 = vmatprep.subr.mxu0 0.0
    %70 = vmatpush1.msra.mxu0 0.0
    %71 = vmatprep.subr.mxu0 0.0
    %72 = vmatpush1.msra.mxu0 0.0
    %73 = vmatprep.subr.mxu0 0.0
    %74 = vmatpush1.msra.mxu0 0.0
    %75 = vmatprep.subr.mxu0 0.0
    %76 = vmatpush1.msra.mxu0 0.0
    %77 = vmatprep.subr.mxu0 0.0
    %78 = vmatpush1.msra.mxu0 0.0
    %79 = vmatprep.subr.mxu0 0.0
    %80 = vmatpush1.msra.mxu0 0.0
    %81 = vmatprep.subr.mxu0 0.0
    %82 = vmatpush1.msra.mxu0 0.0
    %83 = vmatprep.subr.mxu0 0.0
    %84 = vmatpush1.msra.mxu0 0.0
    %85 = vmatprep.subr.mxu0 0.0
    %86 = vmatpush1.msra.mxu0 0.0
    %87 = vmatprep.subr.mxu0 0.0
    %88 = vmatpush1.msra.mxu0 0.0
    %89 = vmatprep.subr.mxu0 0.0
    %90 = vmatpush1.msra.mxu0 0.0
    %91 = vmatprep.subr.mxu0 0.0
    %92 = vmatpush1.msra.mxu0 0.0
    %93 = vmatprep.subr.mxu0 0.0
    %94 = vmatpush1.msra.mxu0 0.0
    %95 = vmatprep.subr.mxu0 0.0
    %96 = vmatpush1.msra.mxu0 0.0
    %97 = vmatprep.subr.mxu0 0.0
    %98 = vmatpush1.msra.mxu0 0.0
    %99 = vmatprep.subr.mxu0 0.0
    %100 = vmatpush1.msra.mxu0 0.0
    %101 = vmatprep.subr.mxu0 0.0
    %102 = vmatpush1.msra.mxu0 0.0
    %103 = vmatprep.subr.mxu0 0.0
    %104 = vmatpush1.msra.mxu0 0.0
    %105 = vmatprep.subr.mxu0 0.0
    %106 = vmatpush1.msra.mxu0 0.0
    %107 = vmatprep.subr.mxu0 0.0
    %108 = vmatpush1.msra.mxu0 0.0
    %109 = vmatprep.subr.mxu0 0.0
    %110 = vmatpush1.msra.mxu0 0.0
    %111 = vmatprep.subr.mxu0 0.0
    %112 = vmatpush1.msra.mxu0 0.0
    %113 = vmatprep.subr.mxu0 0.0
    %114 = vmatpush1.msra.mxu0 0.0
    %115 = vmatprep.subr.mxu0 0.0
    %116 = vmatpush1.msra.mxu0 0.0
    %117 = vmatprep.subr.mxu0 0.0
    %118 = vmatpush1.msra.mxu0 0.0
    %119 = vmatprep.subr.mxu0 0.0
    %120 = vmatpush1.msra.mxu0 0.0
    %121 = vmatprep.mubr.f32.mxu0 0.0
    %122 = vmatmul.mubr.f32.gmra.mrb[0].mxu0 %v55
    %v123 = vpop.f32.mrb[0].mxu0
    %v124 = vadd.f32 %v46, %v123
    %v125 = vpop.f32.mrb[0].mxu0
    %v126 = vadd.f32 %v50, %v125
    %127 = vdwg.mxu0
    %v128 = vmax.f32 %v124, 0.0
    %v129 = vmax.f32 %v126, 0.0
    %v130 = vld [vmem:[%s3] sm:$0xff]
    %v131 = vld [vmem:[%s3 + $0x8] sm:$0xff]
    %v132 = vld [vmem:[%s3 + $0x10] sm:$0xff]
    %v133 = vld [vmem:[%s3 + $0x18] sm:$0xff]
    %v134 = vld [vmem:[%s3 + $0x20] sm:$0xff]
    %v135 = vld [vmem:[%s3 + $0x28] sm:$0xff]
    %v136 = vld [vmem:[%s3 + $0x30] sm:$0xff]
    %v137 = vld [vmem:[%s3 + $0x38] sm:$0xff]
    %v138 = vld [vmem:[%s3 + $0x40] sm:$0xff]
    %v139 = vld [vmem:[%s3 + $0x48] sm:$0xff]
    %v140 = vld [vmem:[%s3 + $0x50] sm:$0xff]
    %v141 = vld [vmem:[%s3 + $0x58] sm:$0xff]
    %v142 = vld [vmem:[%s3 + $0x60] sm:$0xff]
    %v143 = vld [vmem:[%s3 + $0x68] sm:$0xff]
    %v144 = vld [vmem:[%s3 + $0x70] sm:$0xff]
    %v145 = vld [vmem:[%s3 + $0x78] sm:$0xff]
    %v146 = vld [vmem:[%s3 + $0x80] sm:$0xff]
    %v147 = vld [vmem:[%s3 + $0x88] sm:$0xff]
    %v148 = vld [vmem:[%s3 + $0x90] sm:$0xff]
    %v149 = vld [vmem:[%s3 + $0x98] sm:$0xff]
    %v150 = vld [vmem:[%s3 + $0xa0] sm:$0xff]
    %v151 = vld [vmem:[%s3 + $0xa8] sm:$0xff]
    %v152 = vld [vmem:[%s3 + $0xb0] sm:$0xff]
    %v153 = vld [vmem:[%s3 + $0xb8] sm:$0xff]
    %v154 = vld [vmem:[%s3 + $0xc0] sm:$0xff]
    %v155 = vld [vmem:[%s3 + $0xc8] sm:$0xff]
    %v156 = vld [vmem:[%s3 + $0xd0] sm:$0xff]
    %v157 = vld [vmem:[%s3 + $0xd8] sm:$0xff]
    %v158 = vld [vmem:[%s3 + $0xe0] sm:$0xff]
    %v159 = vld [vmem:[%s3 + $0xe8] sm:$0xff]
    %v160 = vld [vmem:[%s3 + $0xf0] sm:$0xff]
    %v161 = vld [vmem:[%s3 + $0xf8] sm:$0xff]
    %v162 = vld [vmem:[%s4] sm:$0x1]
    %v164 = vlaneseq
    %v165 = vshrl.u32 %v164, 7
    %v166 = vsub.s32 0, %v165
    %v167 = vrot.slane %v162, %v166
    %169 = vmatprep.subr.mxu0 0.0
    %170 = vmatpush1.msra.mxu0 %v130
    %171 = vmatprep.subr.mxu0 0.0
    %172 = vmatpush1.msra.mxu0 %v131
    %173 = vmatprep.subr.mxu0 0.0
    %174 = vmatpush1.msra.mxu0 %v132
    %175 = vmatprep.subr.mxu0 0.0
    %176 = vmatpush1.msra.mxu0 %v133
    %177 = vmatprep.subr.mxu0 0.0
    %178 = vmatpush1.msra.mxu0 %v134
    %179 = vmatprep.subr.mxu0 0.0
    %180 = vmatpush1.msra.mxu0 %v135
    %181 = vmatprep.subr.mxu0 0.0
    %182 = vmatpush1.msra.mxu0 %v136
    %183 = vmatprep.subr.mxu0 0.0
    %184 = vmatpush1.msra.mxu0 %v137
    %185 = vmatprep.subr.mxu0 0.0
    %186 = vmatpush1.msra.mxu0 %v138
    %187 = vmatprep.subr.mxu0 0.0
    %188 = vmatpush1.msra.mxu0 %v139
    %189 = vmatprep.subr.mxu0 0.0
    %190 = vmatpush1.msra.mxu0 %v140
    %191 = vmatprep.subr.mxu0 0.0
    %192 = vmatpush1.msra.mxu0 %v141
    %193 = vmatprep.subr.mxu0 0.0
    %194 = vmatpush1.msra.mxu0 %v142
    %195 = vmatprep.subr.mxu0 0.0
    %196 = vmatpush1.msra.mxu0 %v143
    %197 = vmatprep.subr.mxu0 0.0
    %198 = vmatpush1.msra.mxu0 %v144
    %199 = vmatprep.subr.mxu0 0.0
    %200 = vmatpush1.msra.mxu0 %v145
    %201 = vmatprep.subr.mxu0 0.0
    %202 = vmatpush1.msra.mxu0 %v146
    %203 = vmatprep.subr.mxu0 0.0
    %204 = vmatpush1.msra.mxu0 %v147
    %205 = vmatprep.subr.mxu0 0.0
    %206 = vmatpush1.msra.mxu0 %v148
    %207 = vmatprep.subr.mxu0 0.0
    %208 = vmatpush1.msra.mxu0 %v149
    %209 = vmatprep.subr.mxu0 0.0
    %210 = vmatpush1.msra.mxu0 %v150
    %211 = vmatprep.subr.mxu0 0.0
    %212 = vmatpush1.msra.mxu0 %v151
    %213 = vmatprep.subr.mxu0 0.0
    %214 = vmatpush1.msra.mxu0 %v152
    %215 = vmatprep.subr.mxu0 0.0
    %216 = vmatpush1.msra.mxu0 %v153
    %217 = vmatprep.subr.mxu0 0.0
    %218 = vmatpush1.msra.mxu0 %v154
    %219 = vmatprep.subr.mxu0 0.0
    %220 = vmatpush1.msra.mxu0 %v155
    %221 = vmatprep.subr.mxu0 0.0
    %222 = vmatpush1.msra.mxu0 %v156
    %223 = vmatprep.subr.mxu0 0.0
    %224 = vmatpush1.msra.mxu0 %v157
    %225 = vmatprep.subr.mxu0 0.0
    %226 = vmatpush1.msra.mxu0 %v158
    %227 = vmatprep.subr.mxu0 0.0
    %228 = vmatpush1.msra.mxu0 %v159
    %229 = vmatprep.subr.mxu0 0.0
    %230 = vmatpush1.msra.mxu0 %v160
    %231 = vmatprep.subr.mxu0 0.0
    %232 = vmatpush1.msra.mxu0 %v161
    %233 = vmatprep.mubr.f32.mxu0 %v129
    %234 = vmatmul.mubr.f32.gmra.mrb[0].mxu0 %v128
    %v235 = vpop.f32.mrb[0].mxu0
    %v236 = vadd.f32 %v167, %v235
    %v237 = vpop.f32.mrb[0].mxu0
    %238 = vdwg.mxu0
    %v239 = vtanh.pop %v236
    %v240 = vstv %s37
    %v241 = vmul.f32 %v240, %v239
    %v242 = vstv %s36
    %v243 = vadd.f32 %v242, %v241
    %vm244 = vcmask 31744
    %245 = vst.msk [vmem:[%s6] sm:$0xff] %vm244, %v243
    // Predicated region
    $region30: #{actor_forward.1} parent=1 // pred_check
      _
    $region31: #{actor_forward.1} parent=1 // pred_check_branch
      %247 = sbr.rel (0) target = $region33
    $region32: #{actor_forward.1} parent=1 // pred_region
      _
    $region33: #{actor_forward.1} parent=1 // pred_fallthru
      _
    // Predicated region
    $region34: #{actor_forward.1} parent=1 // pred_check
      _
    $region35: #{actor_forward.1} parent=1 // pred_check_branch
      %249 = sbr.rel (0) target = $region37
    $region36: #{actor_forward.1} parent=1 // pred_region
      _
    $region37: #{actor_forward.1} parent=1 // pred_fallthru
      _
    %250 = vsyncpa [#allocation3], 1

</llo_original>
